<compile_context>
chip_gen: v5e
topology: v5e:2x2
jax: 0.10.0
libtpu: 0.0.40
codegen_flags: <defaults>
</compile_context>

<pallas_src>
import functools
import math

import jax
import jax.numpy as jnp
import numpy as np
from jax.experimental import pallas as pl
from jax.experimental.pallas import tpu as pltpu

LANE = 128


def _round_up(x, m):
    return ((x + m - 1) // m) * m


def _vmem_capacity_bytes():
    """Per-core VMEM capacity; falls back to the v7x 64 MiB floor if unavailable."""
    try:
        return int(pltpu.get_tpu_info().vmem_capacity_bytes)
    except Exception:
        return 64 * 1024 * 1024


def _mxu_width():
    """128 on v5e and older, 256 on v6e/v7x (2 x 256x256 MXUs)."""
    try:
        kind = jax.devices()[0].device_kind.lower()
    except Exception:
        return 128
    if any(tag in kind for tag in ("v6", "v7", "trillium")):
        return 256
    return 128


def _pick_tile_rows(m, cap_rows, min_tiles=2):
    """Largest multiple-of-8 divisor of `m` that is <= cap_rows.

    Prefers leaving >= min_tiles grid points so both v7x TensorCores get work.
    Falls back to a single full-extent block for small / odd row counts.
    """
    cap = max(8, min(m, cap_rows))
    divs = [d for d in range(8, cap + 1, 8) if m % d == 0]
    if not divs:
        return m
    pref = [d for d in divs if m // d >= min_tiles]
    return max(pref) if pref else max(divs)


# ----------------------------- Pallas kernels --------------------------------
def conv_stats_kernel(xcol_ref, w_ref, y_ref, part_ref, *, use_bf16):
    """Pass 1: one matmul per tile + per-tile BN partial sums.

    xcol_ref: (tile_m, K)      patch rows, K = ker*ker*C_in folded into the lane axis
    w_ref:    (K, c_pad)       weight matrix, output channels zero-padded to lanes
    y_ref:    (tile_m, c_pad)  conv output tile (lane-dense)
    part_ref: (8, c_pad)       rows 0/1 = [sum, sum_sq]; rows 2..7 = 0 (unmasked store)
    """
    lhs = xcol_ref[...]
    if use_bf16:
        lhs = lhs.astype(jnp.bfloat16)
    acc = jnp.dot(lhs, w_ref[...], preferred_element_type=jnp.float32)
    y_ref[...] = acc
    s1 = jnp.sum(acc, axis=0, keepdims=True)
    s2 = jnp.sum(acc * acc, axis=0, keepdims=True)
    pad = jnp.zeros((6, acc.shape[-1]), jnp.float32)
    part_ref[...] = jnp.concatenate([s1, s2, pad], axis=0)


def bn_act_kernel(y_ref, ss_ref, o_ref, *, slope):
    """Pass 2: fused BatchNorm affine (precomputed scale/shift) + LeakyReLU."""
    z = y_ref[...] * ss_ref[0:1, :] + ss_ref[1:2, :]
    o_ref[...] = jnp.where(z >= 0, z, slope * z)


# ------------------------------- wrapper (JAX) --------------------------------
def conv2d_module_forward(x, weight, bias, gamma, beta, *, ker, slope, eps=1e-5,
                          use_bf16=False):
    """Forward of the PyTorch `Conv2d` block.  x: [N, C_in, H, W] (NCHW)."""
    # `bias` is a per-channel constant added before train-mode BatchNorm; it cancels
    # exactly in the mean subtraction and leaves the variance unchanged, so it never
    # enters the kernels.
    del bias

    N, C_in, H, W = x.shape
    C_out = weight.shape[0]
    assert ker % 2 == 1, "same-size padding path assumes an odd kernel size"

    pad = ker // 2
    K = ker * ker * C_in
    M = N * H * W

    mxu_w = _mxu_width()
    c_pad = _round_up(C_out, LANE) if C_out <= LANE else _round_up(C_out, mxu_w)

    # VMEM budget (per generation) -> compiler limit and tile caps.
    vmem_limit = _vmem_capacity_bytes() // 2
    budget = vmem_limit // 2                          # headroom: weights, stats, pipeline
    k_lanes = _round_up(K, LANE)
    row1 = 2 * 4 * (k_lanes + c_pad)                  # double-buffered lhs + y rows (f32)
    row2 = 2 * 4 * (2 * c_pad)                        # double-buffered in + out rows (f32)
    tile1 = _pick_tile_rows(M, max(8, min(4096, budget // row1)))
    tile2 = _pick_tile_rows(M, max(8, min(8192, budget // row2)))
    n1, n2 = M // tile1, M // tile2

    mm_dtype = jnp.bfloat16 if use_bf16 else jnp.float32

    # ---- boundary layout (once): NCHW -> padded NHWC -> patch-packed (M, K) ----------
    x_nhwc = jnp.transpose(x.astype(jnp.float32), (0, 2, 3, 1))
    x_padded = jnp.pad(x_nhwc, ((0, 0), (pad, pad), (pad, pad), (0, 0)))
    # Fold ker^2*C_in into the minor (lane) axis:
    #   x_col[n, h, w, (kh*ker+kw)*C_in + c] = x_padded[n, h+kh, w+kw, c]
    # Pure data movement at the boundary; the conv compute stays in the Pallas kernel as
    # one dense matmul over K = ker^2*C_in (no reduction grid axis needed).
    taps = [x_padded[:, kh:kh + H, kw:kw + W, :]
            for kh in range(ker) for kw in range(ker)]
    x_col = jnp.concatenate(taps, axis=-1).reshape(M, K)

    # Weight matrix (K, c_pad): w_mat[(kh*ker+kw)*C_in + c, o] = weight[o, c, kh, kw]
    w_mat = jnp.transpose(weight.astype(jnp.float32), (2, 3, 1, 0)).reshape(K, C_out)
    w_mat = jnp.pad(w_mat, ((0, 0), (0, c_pad - C_out))).astype(mm_dtype)

    cparams = pltpu.CompilerParams(
        dimension_semantics=("parallel",),
        vmem_limit_bytes=int(vmem_limit),
    )

    # ---- pass 1: conv (single matmul per tile) + per-tile partial stats ---------------
    pass1 = pl.pallas_call(
        functools.partial(conv_stats_kernel, use_bf16=use_bf16),
        grid=(n1,),
        in_specs=[
            pl.BlockSpec((tile1, K), lambda i: (i, 0)),
            # grid-invariant block index -> the weight tile is fetched into VMEM once.
            pl.BlockSpec((K, c_pad), lambda i: (0, 0)),
        ],
        out_specs=[
            pl.BlockSpec((tile1, c_pad), lambda i: (i, 0)),
            pl.BlockSpec((None, 8, c_pad), lambda i: (i, 0, 0)),
        ],
        out_shape=[
            jax.ShapeDtypeStruct((M, c_pad), jnp.float32),
            jax.ShapeDtypeStruct((n1, 8, c_pad), jnp.float32),
        ],
        compiler_params=cparams,
    )
    y, part = pass1(x_col, w_mat)

    # ---- tiny global BN-stat combine, folded into one scale/shift ---------------------
    totals = jnp.sum(part[:, :2, :], axis=0)             # (2, c_pad)
    gamma_pad = jnp.pad(gamma.astype(jnp.float32), (0, c_pad - C_out))
    beta_pad = jnp.pad(beta.astype(jnp.float32), (0, c_pad - C_out))
    mean = totals[0] / M
    # NOTE: E[x^2] - mean^2 in f32 is adequate for O(1) activations at these sizes; use a
    # shifted sum-of-squares if much larger M / activation magnitudes are expected.
    var = jnp.maximum(totals[1] / M - mean * mean, 0.0)   # biased batch variance
    scale = gamma_pad * jax.lax.rsqrt(var + eps)
    shift = beta_pad - mean * scale
    ss = jnp.zeros((8, c_pad), jnp.float32).at[0].set(scale).at[1].set(shift)

    # ---- pass 2: normalize + LeakyReLU (large flat-M tiles, aliases the conv buffer) --
    pass2 = pl.pallas_call(
        functools.partial(bn_act_kernel, slope=float(slope)),
        grid=(n2,),
        in_specs=[
            pl.BlockSpec((tile2, c_pad), lambda i: (i, 0)),
            pl.BlockSpec((8, c_pad), lambda i: (0, 0)),
        ],
        out_specs=pl.BlockSpec((tile2, c_pad), lambda i: (i, 0)),
        out_shape=jax.ShapeDtypeStruct((M, c_pad), jnp.float32),
        input_output_aliases={0: 0},
        compiler_params=cparams,
    )
    y_act = pass2(y, ss)

    # ---- boundary layout (once): lane-dense (M, c_pad) -> NCHW, drop padded channels --
    out_nhwc = y_act.reshape(N, H, W, c_pad)[..., :C_out]
    return jnp.transpose(out_nhwc, (0, 3, 1, 2))


# ---------------------------- pure-JAX reference ------------------------------
def reference_forward(x, weight, bias, gamma, beta, *, ker, slope, eps=1e-5):
    pad = int(ker / 2)
    y = jax.lax.conv_general_dilated(
        x.astype(jnp.float32), weight.astype(jnp.float32),
        window_strides=(1, 1), padding=[(pad, pad), (pad, pad)],
        dimension_numbers=("NCHW", "OIHW", "NCHW"))
    y = y + bias.reshape(1, -1, 1, 1)
    mean = jnp.mean(y, axis=(0, 2, 3), keepdims=True)
    var = jnp.mean((y - mean) ** 2, axis=(0, 2, 3), keepdims=True)
    y = (y - mean) * jax.lax.rsqrt(var + eps)
    y = y * gamma.reshape(1, -1, 1, 1) + beta.reshape(1, -1, 1, 1)
    return jnp.where(y >= 0, y, slope * y)


# ----------------------------------- main --------------------------------------
if __name__ == "__main__":
    # Mirrors Conv2d(c_in, c_out, ker, 'leaky_relu', slope)
    N, C_in, H, W = 2, 4, 16, 16
    C_out, ker, slope = 8, 3, 0.1

    key = jax.random.PRNGKey(0)
    k_x, k_w, k_b = jax.random.split(key, 3)

    x = jax.random.normal(k_x, (N, C_in, H, W), dtype=jnp.float32)

    # nn.init.xavier_uniform_ for the conv weight [C_out, C_in, ker, ker]
    fan_in = C_in * ker * ker
    fan_out = C_out * ker * ker
    xav_bound = math.sqrt(6.0 / (fan_in + fan_out))
    weight = jax.random.uniform(k_w, (C_out, C_in, ker, ker),
                                minval=-xav_bound, maxval=xav_bound,
                                dtype=jnp.float32)
    # default nn.Conv2d bias init: U(-1/sqrt(fan_in), 1/sqrt(fan_in))
    b_bound = 1.0 / math.sqrt(fan_in)
    bias = jax.random.uniform(k_b, (C_out,), minval=-b_bound, maxval=b_bound,
                              dtype=jnp.float32)
    # BatchNorm2d affine defaults
    gamma = jnp.ones((C_out,), dtype=jnp.float32)
    beta = jnp.zeros((C_out,), dtype=jnp.float32)

    fwd = jax.jit(functools.partial(conv2d_module_forward, ker=ker, slope=slope))
    out = fwd(x, weight, bias, gamma, beta)
    out = jax.block_until_ready(out)

    ref = reference_forward(x, weight, bias, gamma, beta, ker=ker, slope=slope)
    np.testing.assert_allclose(np.asarray(out), np.asarray(ref),
                               rtol=1e-4, atol=1e-4)

    print("KERNEL_OK")
</pallas_src>

<mosaic_0001>
module attributes {stable_mosaic.version = 11 : i64} {
  func.func @conv_stats_kernel(%arg0: i32, %arg1: memref<256x36xf32, #tpu.memory_space<vmem>>, %arg2: memref<36x128xf32, #tpu.memory_space<vmem>>, %arg3: memref<256x128xf32, #tpu.memory_space<vmem>>, %arg4: memref<1x8x128xf32, #tpu.memory_space<vmem>>) attributes {dimension_semantics = [#tpu.dimension_semantics<parallel>], iteration_bounds = array<i64: 2>, scalar_prefetch = 0 : i64, scratch_operands = 0 : i64, tpu.core_type = #tpu.core_type<tc>, window_params = [{transform_indices = @transform_0, window_bounds = array<i64: 256, 36>}, {pipeline_mode = #tpu.pipeline_mode<synchronous>, transform_indices = @transform_1, window_bounds = array<i64: 36, 128>}, {transform_indices = @transform_2, window_bounds = array<i64: 256, 128>}, {transform_indices = @transform_3, window_bounds = array<i64: 1, 8, 128>}]} {
    %c0 = arith.constant 0 : index
    %c0_0 = arith.constant 0 : index
    %0 = vector.load %arg1[%c0, %c0_0] : memref<256x36xf32, #tpu.memory_space<vmem>>, vector<256x36xf32>
    %c0_1 = arith.constant 0 : index
    %c0_2 = arith.constant 0 : index
    %1 = vector.load %arg2[%c0_1, %c0_2] : memref<36x128xf32, #tpu.memory_space<vmem>>, vector<36x128xf32>
    %cst = arith.constant dense<0.000000e+00> : vector<256x128xf32>
    %2 = tpu.matmul %0, %1, %cst {dimension_numbers = #tpu.dot_dimension_numbers<[1], [0], [0], [1], [0, 0, 1, 1], [], []>} : vector<256x36xf32>, vector<36x128xf32>, vector<256x128xf32> -> vector<256x128xf32>
    %c0_3 = arith.constant 0 : index
    %c0_4 = arith.constant 0 : index
    %3 = vector.load %arg3[%c0_3, %c0_4] : memref<256x128xf32, #tpu.memory_space<vmem>>, vector<256x128xf32>
    tpu.vector_store %arg3[%c0_3, %c0_4], %2 {strides = array<i32>} : memref<256x128xf32, #tpu.memory_space<vmem>>, vector<256x128xf32>,
    %cst_5 = arith.constant dense<0.000000e+00> : vector<128xf32>
    %4 = vector.multi_reduction <add>, %2, %cst_5 [0] : vector<256x128xf32> to vector<128xf32>
    %5 = vector.shape_cast %4 : vector<128xf32> to vector<1x128xf32>
    %6 = arith.mulf %2, %2 : vector<256x128xf32>
    %cst_6 = arith.constant dense<0.000000e+00> : vector<128xf32>
    %7 = vector.multi_reduction <add>, %6, %cst_6 [0] : vector<256x128xf32> to vector<128xf32>
    %8 = vector.shape_cast %7 : vector<128xf32> to vector<1x128xf32>
    %cst_7 = arith.constant 0.000000e+00 : f32
    %9 = vector.broadcast %cst_7 : f32 to vector<6x128xf32>
    %10 = tpu.concatenate %5, %8, %9 in 0 : vector<1x128xf32>, vector<1x128xf32>, vector<6x128xf32> -> vector<8x128xf32>
    %c0_8 = arith.constant 0 : index
    %c0_9 = arith.constant 0 : index
    %c0_10 = arith.constant 0 : index
    %11 = vector.load %arg4[%c0_8, %c0_9, %c0_10] : memref<1x8x128xf32, #tpu.memory_space<vmem>>, vector<1x8x128xf32>
    %12 = vector.shape_cast %11 : vector<1x8x128xf32> to vector<8x128xf32>
    %13 = vector.shape_cast %10 : vector<8x128xf32> to vector<1x8x128xf32>
    tpu.vector_store %arg4[%c0_8, %c0_9, %c0_10], %13 {strides = array<i32>} : memref<1x8x128xf32, #tpu.memory_space<vmem>>, vector<1x8x128xf32>,
    return
  }
  func.func @transform_0(%arg0: i32) -> (i32, i32) {
    %c0_i32 = arith.constant 0 : i32
    %c0_i32_0 = arith.constant 0 : i32
    return %arg0, %c0_i32 : i32, i32
  }
  func.func @transform_1(%arg0: i32) -> (i32, i32) {
    %c0_i32 = arith.constant 0 : i32
    %c0_i32_0 = arith.constant 0 : i32
    %c0_i32_1 = arith.constant 0 : i32
    return %c0_i32, %c0_i32_0 : i32, i32
  }
  func.func @transform_2(%arg0: i32) -> (i32, i32) {
    %c0_i32 = arith.constant 0 : i32
    %c0_i32_0 = arith.constant 0 : i32
    return %arg0, %c0_i32 : i32, i32
  }
  func.func @transform_3(%arg0: i32) -> (i32, i32, i32) {
    %c0_i32 = arith.constant 0 : i32
    %c0_i32_0 = arith.constant 0 : i32
    %c0_i32_1 = arith.constant 0 : i32
    return %arg0, %c0_i32, %c0_i32_0 : i32, i32, i32
  }
}

module attributes {stable_mosaic.version = 11 : i64} {
  func.func @bn_act_kernel(%arg0: i32, %arg1: memref<256x128xf32, #tpu.memory_space<vmem>>, %arg2: memref<8x128xf32, #tpu.memory_space<vmem>>, %arg3: memref<256x128xf32, #tpu.memory_space<vmem>>) attributes {dimension_semantics = [#tpu.dimension_semantics<parallel>], iteration_bounds = array<i64: 2>, scalar_prefetch = 0 : i64, scratch_operands = 0 : i64, tpu.core_type = #tpu.core_type<tc>, window_params = [{transform_indices = @transform_0, window_bounds = array<i64: 256, 128>}, {pipeline_mode = #tpu.pipeline_mode<synchronous>, transform_indices = @transform_1, window_bounds = array<i64: 8, 128>}, {transform_indices = @transform_2, window_bounds = array<i64: 256, 128>}]} {
    %c0 = arith.constant 0 : index
    %c0_0 = arith.constant 0 : index
    %0 = vector.load %arg1[%c0, %c0_0] : memref<256x128xf32, #tpu.memory_space<vmem>>, vector<256x128xf32>
    %c0_1 = arith.constant 0 : index
    %c0_2 = arith.constant 0 : index
    %1 = vector.load %arg2[%c0_1, %c0_2] : memref<8x128xf32, #tpu.memory_space<vmem>>, vector<1x128xf32>
    %2 = vector.broadcast %1 : vector<1x128xf32> to vector<256x128xf32>
    %3 = arith.mulf %0, %2 : vector<256x128xf32>
    %c1 = arith.constant 1 : index
    %c0_3 = arith.constant 0 : index
    %4 = vector.load %arg2[%c1, %c0_3] : memref<8x128xf32, #tpu.memory_space<vmem>>, vector<1x128xf32>
    %5 = vector.broadcast %4 : vector<1x128xf32> to vector<256x128xf32>
    %6 = arith.addf %3, %5 : vector<256x128xf32>
    %cst = arith.constant 0.000000e+00 : f32
    %7 = vector.broadcast %cst : f32 to vector<256x128xf32>
    %8 = arith.cmpf oge, %6, %7 : vector<256x128xf32>
    %cst_4 = arith.constant 1.000000e-01 : f32
    %9 = vector.broadcast %cst_4 : f32 to vector<256x128xf32>
    %10 = arith.mulf %9, %6 : vector<256x128xf32>
    %11 = arith.select %8, %6, %10 : vector<256x128xi1>, vector<256x128xf32>
    %c0_5 = arith.constant 0 : index
    %c0_6 = arith.constant 0 : index
    %12 = vector.load %arg3[%c0_5, %c0_6] : memref<256x128xf32, #tpu.memory_space<vmem>>, vector<256x128xf32>
    tpu.vector_store %arg3[%c0_5, %c0_6], %11 {strides = array<i32>} : memref<256x128xf32, #tpu.memory_space<vmem>>, vector<256x128xf32>,
    return
  }
  func.func @transform_0(%arg0: i32) -> (i32, i32) {
    %c0_i32 = arith.constant 0 : i32
    %c0_i32_0 = arith.constant 0 : i32
    return %arg0, %c0_i32 : i32, i32
  }
  func.func @transform_1(%arg0: i32) -> (i32, i32) {
    %c0_i32 = arith.constant 0 : i32
    %c0_i32_0 = arith.constant 0 : i32
    %c0_i32_1 = arith.constant 0 : i32
    return %c0_i32, %c0_i32_0 : i32, i32
  }
  func.func @transform_2(%arg0: i32) -> (i32, i32) {
    %c0_i32 = arith.constant 0 : i32
    %c0_i32_0 = arith.constant 0 : i32
    return %arg0, %c0_i32 : i32, i32
  }
}

</mosaic_0001>

<llo_original>
// kernel: conv2d_module_forward.2
$region0: #{conv2d_module_forward.2}
  #allocation0 [shape = 'u32[]', space=smem, size = 0x4, offset = 0x4, fixed_abs, tag = 'smem constant byte address 0x4 - core index']
  #allocation1 [shape = 'u32[72,128]{1,0:T(1,128)}', space=vmem, size = 0x9000, scoped, tag = 'internal scratch']
  %s0 = inlined_call_operand.vmem [shape: f32[512,36], index: 0, kind: input, shape index: {}]
  %s1 = inlined_call_operand.vmem [shape: f32[36,128], index: 1, kind: input, shape index: {}]
  %s2 = inlined_call_operand.vmem [shape: f32[512,128], index: 2, kind: output, shape index: {0}]
  %s3 = inlined_call_operand.vmem [shape: f32[2,8,128], index: 3, kind: output, shape index: {1}]
  %4 = xla_tuple %s2, %s3
  %s5 = sld [smem:[#allocation0]]
  $region49: #{conv2d_module_forward.2} parent=0
    _
  %s7 = ssub.s32 1, %s5
  %s8 = scalar_select 0, %s7, %s5
  loop: start=0, step=1, limit=4
  $region2: #{conv2d_module_forward.2} parent=0 // loop_pre_header
    _
  $region3: #{conv2d_module_forward.2} parent=0 // loop_header
    %s10 = sphi 0, %s14
    %p11 = scmp.ge.s32.totalorder %s10, 4
    %s20 = sphi 0, %s22
    %s23 = sphi 0, %s20
    %s24 = sphi 0, %s23
    %s40 = sphi 0, %s24
    %s44 = sphi 0, %s44
    %s46 = sphi 0, %s44
    %s47 = sphi 0, %s46
    %s61 = sphi 0, %s47
    %s67 = sphi 0, %s69
    %s70 = sphi 0, %s67
    %s71 = sphi 0, %s70
    %s87 = sphi 0, %s71
    %s93 = sphi 0, %s95
    %s96 = sphi 0, %s93
    %s97 = sphi 0, %s96
    %s113 = sphi 0, %s97
  $region4: #{conv2d_module_forward.2} parent=0 // loop_header_branch
    %13 = sbr.rel (%p11) target = $region8
  $region5: #{conv2d_module_forward.2} parent=0 // loop_body
    %s15 = ssub.s32 %s10, 1
    %s16 = ssub.s32 %s10, 2
    %s17 = sadd.s32 %s10, 1
    %s18 = ssub.s32 %s10, %s17
    %p19 = scmp.eq.s32.totalorder %s18, 0
    %s21 = sadd.s32 %s20, 1
    %s22 = scalar_select %p19, %s20, %s21
    %p25 = pneg %p19
    %p26 = scmp.eq.s32.totalorder %s10, 1
    %p27 = por %p25, %p26
    %p28 = scmp.ne.s32.totalorder %s20, %s23
    %p29 = scmp.eq.s32.totalorder %s10, 0
    %p30 = por %p28, %p29
    %p31 = scmp.ne.s32.totalorder %s20, %s23
    %p32 = scmp.eq.s32.totalorder %s15, 1
    %p33 = por %p31, %p32
    %p34 = scmp.ne.s32.totalorder %s23, %s24
    %p35 = scmp.eq.s32.totalorder %s15, 0
    %p36 = por %p34, %p35
    %p37 = scmp.ne.s32.totalorder %s23, %s24
    %p38 = scmp.eq.s32.totalorder %s16, 1
    %p39 = por %p37, %p38
    %p41 = scmp.ne.s32.totalorder %s24, %s40
    %p42 = scmp.eq.s32.totalorder %s16, 0
    %p43 = por %p41, %p42
    %s45 = sadd.s32 %s44, 1
    %p48 = scmp.eq.s32.totalorder %s10, 1
    %p49 = scmp.ne.s32.totalorder %s44, %s46
    %p50 = scmp.eq.s32.totalorder %s10, 0
    %p51 = por %p49, %p50
    %p52 = scmp.ne.s32.totalorder %s44, %s46
    %p53 = scmp.eq.s32.totalorder %s15, 1
    %p54 = por %p52, %p53
    %p55 = scmp.ne.s32.totalorder %s46, %s47
    %p56 = scmp.eq.s32.totalorder %s15, 0
    %p57 = por %p55, %p56
    %p58 = scmp.ne.s32.totalorder %s46, %s47
    %p59 = scmp.eq.s32.totalorder %s16, 1
    %p60 = por %p58, %p59
    %p62 = scmp.ne.s32.totalorder %s47, %s61
    %p63 = scmp.eq.s32.totalorder %s16, 0
    %p64 = por %p62, %p63
    %s65 = ssub.s32 %s10, %s17
    %p66 = scmp.eq.s32.totalorder %s65, 0
    %s68 = sadd.s32 %s67, 1
    %s69 = scalar_select %p66, %s67, %s68
    %p72 = pneg %p66
    %p73 = scmp.eq.s32.totalorder %s10, 1
    %p74 = por %p72, %p73
    %p75 = scmp.ne.s32.totalorder %s67, %s70
    %p76 = scmp.eq.s32.totalorder %s10, 0
    %p77 = por %p75, %p76
    %p78 = scmp.ne.s32.totalorder %s67, %s70
    %p79 = scmp.eq.s32.totalorder %s15, 1
    %p80 = por %p78, %p79
    %p81 = scmp.ne.s32.totalorder %s70, %s71
    %p82 = scmp.eq.s32.totalorder %s15, 0
    %p83 = por %p81, %p82
    %p84 = scmp.ne.s32.totalorder %s70, %s71
    %p85 = scmp.eq.s32.totalorder %s16, 1
    %p86 = por %p84, %p85
    %p88 = scmp.ne.s32.totalorder %s71, %s87
    %p89 = scmp.eq.s32.totalorder %s16, 0
    %p90 = por %p88, %p89
    %s91 = ssub.s32 %s10, %s17
    %p92 = scmp.eq.s32.totalorder %s91, 0
    %s94 = sadd.s32 %s93, 1
    %s95 = scalar_select %p92, %s93, %s94
    %p98 = pneg %p92
    %p99 = scmp.eq.s32.totalorder %s10, 1
    %p100 = por %p98, %p99
    %p101 = scmp.ne.s32.totalorder %s93, %s96
    %p102 = scmp.eq.s32.totalorder %s10, 0
    %p103 = por %p101, %p102
    %p104 = scmp.ne.s32.totalorder %s93, %s96
    %p105 = scmp.eq.s32.totalorder %s15, 1
    %p106 = por %p104, %p105
    %p107 = scmp.ne.s32.totalorder %s96, %s97
    %p108 = scmp.eq.s32.totalorder %s15, 0
    %p109 = por %p107, %p108
    %p110 = scmp.ne.s32.totalorder %s96, %s97
    %p111 = scmp.eq.s32.totalorder %s16, 1
    %p112 = por %p110, %p111
    %p114 = scmp.ne.s32.totalorder %s97, %s113
    %p115 = scmp.eq.s32.totalorder %s16, 0
    %p116 = por %p114, %p115
    %p117 = scmp.le.s32.totalorder 1, %s10
    %p118 = scmp.lt.s32.totalorder %s10, 3
    %p119 = pnand %p117, %p118
    %p120 = pneg %p119
    // Predicated region
    $region9: #{conv2d_module_forward.2} parent=5 // pred_check
      _
    $region10: #{conv2d_module_forward.2} parent=5 // pred_check_branch
      %122 = sbr.rel (%p119) target = $region12
    $region11: #{conv2d_module_forward.2} parent=5 // pred_region
      %s123 = ssub.s32 %s10, 1
      // Predicated region
      $region13: #{conv2d_module_forward.2} parent=11 // pred_check
        %p124 = pneg %p57
      $region14: #{conv2d_module_forward.2} parent=11 // pred_check_branch
        %126 = sbr.rel (%p124) target = $region16
      $region15: #{conv2d_module_forward.2} parent=11 // pred_region
        _
      $region16: #{conv2d_module_forward.2} parent=11 // pred_fallthru
        _
    $region12: #{conv2d_module_forward.2} parent=5 // pred_fallthru
      _
    %p127 = scmp.lt.s32.totalorder %s10, 2
    // Predicated region
    $region17: #{conv2d_module_forward.2} parent=5 // pred_check
      %p128 = pneg %p127
    $region18: #{conv2d_module_forward.2} parent=5 // pred_check_branch
      %130 = sbr.rel (%p128) target = $region20
    $region19: #{conv2d_module_forward.2} parent=5 // pred_region
      // Predicated region
      $region21: #{conv2d_module_forward.2} parent=19 // pred_check
        %p131 = pneg %p30
      $region22: #{conv2d_module_forward.2} parent=19 // pred_check_branch
        %133 = sbr.rel (%p131) target = $region24
      $region23: #{conv2d_module_forward.2} parent=19 // pred_region
        %s134 = smul.u32 32, %s10
        %p135 = scmp.lt.s32.totalorder %s134, 63
        %s136 = scalar_select %p135, %s134, 63
        %s137 = smul.addr %s136, 8
        %s138 = scalar_lea.vmem %s0, %s137
        %s139 = smul.u32 32, %s10
      $region24: #{conv2d_module_forward.2} parent=19 // pred_fallthru
        _
    $region20: #{conv2d_module_forward.2} parent=5 // pred_fallthru
      _
    %p140 = scmp.le.s32.totalorder 1, %s10
    %p141 = scmp.lt.s32.totalorder %s10, 3
    %p142 = pnand %p140, %p141
    %p143 = pneg %p142
    // Predicated region
    $region25: #{conv2d_module_forward.2} parent=5 // pred_check
      _
    $region26: #{conv2d_module_forward.2} parent=5 // pred_check_branch
      %145 = sbr.rel (%p142) target = $region28
    $region27: #{conv2d_module_forward.2} parent=5 // pred_region
      %s146 = ssub.s32 %s10, 1
      %s147 = smul.u32 32, %s15
      %p148 = scmp.lt.s32.totalorder %s147, 63
      %s149 = scalar_select %p148, %s147, 63
      %s150 = smul.addr %s149, 8
      %s151 = scalar_lea.vmem %s0, %s150
      %p152 = pneg %p36
      %p153 = pneg %p33
      %p154 = pneg %p57
      %p155 = pneg %p54
      %p156 = pneg %p83
      %p157 = pneg %p80
      %s158 = smul.u32 32, %s15
      %p159 = scmp.lt.s32.totalorder %s158, 63
      %s160 = scalar_select %p159, %s158, 63
      %s161 = smul.addr %s160, 8
      %s162 = scalar_lea.vmem %s2, %s161
      %p163 = pneg %p109
      %p164 = pneg %p106
      %p165 = scmp.lt.s32.totalorder %s15, 1
      %s166 = scalar_select %p165, %s15, 1
      %s167 = smul.addr %s166, 8
      %s168 = scalar_lea.vmem %s3, %s167
      %s169 = smul.u32 32, %s15
      %p170 = scmp.lt.s32.totalorder %s169, 63
      %s171 = scalar_select %p170, %s169, 63
      %s172 = smul.addr %s171, 8
      %s173 = scalar_lea.vmem %s0, %s172
      %s174 = smul.u32 32, %s15
      %s175 = smul.u32 32, %s15
      %p176 = scmp.lt.s32.totalorder %s175, 63
      %s177 = scalar_select %p176, %s175, 63
      %s178 = smul.addr %s177, 8
      %s179 = scalar_lea.vmem %s2, %s178
      %s180 = smul.u32 32, %s15
      %p181 = scmp.lt.s32.totalorder %s15, 1
      %s182 = scalar_select %p181, %s15, 1
      %s183 = smul.addr %s182, 8
      %s184 = scalar_lea.vmem %s3, %s183
      %v185 = vld [vmem:[%s173] sm:$0xff]
      %v186 = vld [vmem:[%s173 + $0x8] sm:$0xff]
      %v187 = vld [vmem:[%s173 + $0x10] sm:$0xff]
      %v188 = vld [vmem:[%s173 + $0x18] sm:$0xff]
      %v189 = vld [vmem:[%s173 + $0x20] sm:$0xff]
      %v190 = vld [vmem:[%s173 + $0x28] sm:$0xff]
      %v191 = vld [vmem:[%s173 + $0x30] sm:$0xff]
      %v192 = vld [vmem:[%s173 + $0x38] sm:$0xff]
      %v193 = vld [vmem:[%s173 + $0x40] sm:$0xff]
      %v194 = vld [vmem:[%s173 + $0x48] sm:$0xff]
      %v195 = vld [vmem:[%s173 + $0x50] sm:$0xff]
      %v196 = vld [vmem:[%s173 + $0x58] sm:$0xff]
      %v197 = vld [vmem:[%s173 + $0x60] sm:$0xff]
      %v198 = vld [vmem:[%s173 + $0x68] sm:$0xff]
      %v199 = vld [vmem:[%s173 + $0x70] sm:$0xff]
      %v200 = vld [vmem:[%s173 + $0x78] sm:$0xff]
      %v201 = vld [vmem:[%s173 + $0x80] sm:$0xff]
      %v202 = vld [vmem:[%s173 + $0x88] sm:$0xff]
      %v203 = vld [vmem:[%s173 + $0x90] sm:$0xff]
      %v204 = vld [vmem:[%s173 + $0x98] sm:$0xff]
      %v205 = vld [vmem:[%s173 + $0xa0] sm:$0xff]
      %v206 = vld [vmem:[%s173 + $0xa8] sm:$0xff]
      %v207 = vld [vmem:[%s173 + $0xb0] sm:$0xff]
      %v208 = vld [vmem:[%s173 + $0xb8] sm:$0xff]
      %v209 = vld [vmem:[%s173 + $0xc0] sm:$0xff]
      %v210 = vld [vmem:[%s173 + $0xc8] sm:$0xff]
      %v211 = vld [vmem:[%s173 + $0xd0] sm:$0xff]
      %v212 = vld [vmem:[%s173 + $0xd8] sm:$0xff]
      %v213 = vld [vmem:[%s173 + $0xe0] sm:$0xff]
      %v214 = vld [vmem:[%s173 + $0xe8] sm:$0xff]
      %v215 = vld [vmem:[%s173 + $0xf0] sm:$0xff]
      %v216 = vld [vmem:[%s173 + $0xf8] sm:$0xff]
      %v217 = vld [vmem:[%s1] sm:$0xff]
      %v218 = vld [vmem:[%s1 + $0x8] sm:$0xff]
      %v219 = vld [vmem:[%s1 + $0x10] sm:$0xff]
      %v220 = vld [vmem:[%s1 + $0x18] sm:$0xff]
      %v221 = vld [vmem:[%s1 + $0x20] sm:$0xf]
      %vm222 = vcmask 293888
      %v224 = vsel %vm222, %v185, 0
      %v227 = vsel %vm222, %v186, 0
      %v230 = vsel %vm222, %v187, 0
      %v233 = vsel %vm222, %v188, 0
      %v236 = vsel %vm222, %v189, 0
      %v239 = vsel %vm222, %v190, 0
      %v242 = vsel %vm222, %v191, 0
      %v245 = vsel %vm222, %v192, 0
      %v248 = vsel %vm222, %v193, 0
      %v251 = vsel %vm222, %v194, 0
      %v254 = vsel %vm222, %v195, 0
      %v257 = vsel %vm222, %v196, 0
      %v260 = vsel %vm222, %v197, 0
      %v263 = vsel %vm222, %v198, 0
      %v266 = vsel %vm222, %v199, 0
      %v269 = vsel %vm222, %v200, 0
      %v272 = vsel %vm222, %v201, 0
      %v275 = vsel %vm222, %v202, 0
      %v278 = vsel %vm222, %v203, 0
      %v281 = vsel %vm222, %v204, 0
      %v284 = vsel %vm222, %v205, 0
      %v287 = vsel %vm222, %v206, 0
      %v290 = vsel %vm222, %v207, 0
      %v293 = vsel %vm222, %v208, 0
      %v296 = vsel %vm222, %v209, 0
      %v299 = vsel %vm222, %v210, 0
      %v302 = vsel %vm222, %v211, 0
      %v305 = vsel %vm222, %v212, 0
      %v308 = vsel %vm222, %v213, 0
      %v311 = vsel %vm222, %v214, 0
      %v314 = vsel %vm222, %v215, 0
      %v317 = vsel %vm222, %v216, 0
      %vm319 = vcmask 1043456
      %v321 = vsel %vm319, %v221, 0
      %323 = vmatpush.msra.mxu0 0.0
      %324 = vmatpush.msra.mxu0 0.0
      %325 = vmatpush.msra.mxu0 0.0
      %326 = vmatpush.msra.mxu0 0.0
      %327 = vmatpush.msra.mxu0 0.0
      %328 = vmatpush.msra.mxu0 0.0
      %329 = vmatpush.msra.mxu0 0.0
      %330 = vmatpush.msra.mxu0 0.0
      %331 = vmatpush.msra.mxu0 0.0
      %332 = vmatpush.msra.mxu0 0.0
      %333 = vmatpush.msra.mxu0 0.0
      %334 = vmatpush.msra.mxu0 %v321
      %335 = vmatpush.msra.mxu0 %v220
      %336 = vmatpush.msra.mxu0 %v219
      %337 = vmatpush.msra.mxu0 %v218
      %338 = vmatpush.msra.mxu0 %v217
      %339 = vmatmul.f32.gmra.mxu0 %v224
      %v340 = vpop.f32.mrf.mxu0
      %v341 = vadd.f32 0.0, %v340
      %342 = vmatmul.f32.gmra.mxu0 %v227
      %v343 = vpop.f32.mrf.mxu0
      %v344 = vadd.f32 0.0, %v343
      %345 = vmatmul.f32.gmra.mxu0 %v230
      %v346 = vpop.f32.mrf.mxu0
      %v347 = vadd.f32 0.0, %v346
      %348 = vmatmul.f32.gmra.mxu0 %v233
      %v349 = vpop.f32.mrf.mxu0
      %v350 = vadd.f32 0.0, %v349
      %351 = vmatmul.f32.gmra.mxu0 %v236
      %v352 = vpop.f32.mrf.mxu0
      %v353 = vadd.f32 0.0, %v352
      %354 = vmatmul.f32.gmra.mxu0 %v239
      %v355 = vpop.f32.mrf.mxu0
      %v356 = vadd.f32 0.0, %v355
      %357 = vmatmul.f32.gmra.mxu0 %v242
      %v358 = vpop.f32.mrf.mxu0
      %v359 = vadd.f32 0.0, %v358
      %360 = vmatmul.f32.gmra.mxu0 %v245
      %v361 = vpop.f32.mrf.mxu0
      %v362 = vadd.f32 0.0, %v361
      %363 = vmatmul.f32.gmra.mxu0 %v248
      %v364 = vpop.f32.mrf.mxu0
      %v365 = vadd.f32 0.0, %v364
      %366 = vmatmul.f32.gmra.mxu0 %v251
      %v367 = vpop.f32.mrf.mxu0
      %v368 = vadd.f32 0.0, %v367
      %369 = vmatmul.f32.gmra.mxu0 %v254
      %v370 = vpop.f32.mrf.mxu0
      %v371 = vadd.f32 0.0, %v370
      %372 = vmatmul.f32.gmra.mxu0 %v257
      %v373 = vpop.f32.mrf.mxu0
      %v374 = vadd.f32 0.0, %v373
      %375 = vmatmul.f32.gmra.mxu0 %v260
      %v376 = vpop.f32.mrf.mxu0
      %v377 = vadd.f32 0.0, %v376
      %378 = vmatmul.f32.gmra.mxu0 %v263
      %v379 = vpop.f32.mrf.mxu0
      %v380 = vadd.f32 0.0, %v379
      %381 = vmatmul.f32.gmra.mxu0 %v266
      %v382 = vpop.f32.mrf.mxu0
      %v383 = vadd.f32 0.0, %v382
      %384 = vmatmul.f32.gmra.mxu0 %v269
      %v385 = vpop.f32.mrf.mxu0
      %v386 = vadd.f32 0.0, %v385
      %387 = vmatmul.f32.gmra.mxu0 %v272
      %v388 = vpop.f32.mrf.mxu0
      %v389 = vadd.f32 0.0, %v388
      %390 = vmatmul.f32.gmra.mxu0 %v275
      %v391 = vpop.f32.mrf.mxu0
      %v392 = vadd.f32 0.0, %v391
      %393 = vmatmul.f32.gmra.mxu0 %v278
      %v394 = vpop.f32.mrf.mxu0
      %v395 = vadd.f32 0.0, %v394
      %396 = vmatmul.f32.gmra.mxu0 %v281
      %v397 = vpop.f32.mrf.mxu0
      %v398 = vadd.f32 0.0, %v397
      %399 = vmatmul.f32.gmra.mxu0 %v284
      %v400 = vpop.f32.mrf.mxu0
      %v401 = vadd.f32 0.0, %v400
      %402 = vmatmul.f32.gmra.mxu0 %v287
      %v403 = vpop.f32.mrf.mxu0
      %v404 = vadd.f32 0.0, %v403
      %405 = vmatmul.f32.gmra.mxu0 %v290
      %v406 = vpop.f32.mrf.mxu0
      %v407 = vadd.f32 0.0, %v406
      %408 = vmatmul.f32.gmra.mxu0 %v293
      %v409 = vpop.f32.mrf.mxu0
      %v410 = vadd.f32 0.0, %v409
      %411 = vmatmul.f32.gmra.mxu0 %v296
      %v412 = vpop.f32.mrf.mxu0
      %v413 = vadd.f32 0.0, %v412
      %414 = vmatmul.f32.gmra.mxu0 %v299
      %v415 = vpop.f32.mrf.mxu0
      %v416 = vadd.f32 0.0, %v415
      %417 = vmatmul.f32.gmra.mxu0 %v302
      %v418 = vpop.f32.mrf.mxu0
      %v419 = vadd.f32 0.0, %v418
      %420 = vmatmul.f32.gmra.mxu0 %v305
      %v421 = vpop.f32.mrf.mxu0
      %v422 = vadd.f32 0.0, %v421
      %423 = vmatmul.f32.gmra.mxu0 %v308
      %v424 = vpop.f32.mrf.mxu0
      %v425 = vadd.f32 0.0, %v424
      %426 = vmatmul.f32.gmra.mxu0 %v311
      %v427 = vpop.f32.mrf.mxu0
      %v428 = vadd.f32 0.0, %v427
      %429 = vmatmul.f32.gmra.mxu0 %v314
      %v430 = vpop.f32.mrf.mxu0
      %v431 = vadd.f32 0.0, %v430
      %432 = vmatmul.f32.gmra.mxu0 %v317
      %v433 = vpop.f32.mrf.mxu0
      %v434 = vadd.f32 0.0, %v433
      %435 = vdwg.mxu0
      %436 = vst [vmem:[%s179] sm:$0xff] %v341
      %437 = vst [vmem:[%s179 + $0x8] sm:$0xff] %v344
      %438 = vst [vmem:[%s179 + $0x10] sm:$0xff] %v347
      %439 = vst [vmem:[%s179 + $0x18] sm:$0xff] %v350
      %440 = vst [vmem:[%s179 + $0x20] sm:$0xff] %v353
      %441 = vst [vmem:[%s179 + $0x28] sm:$0xff] %v356
      %442 = vst [vmem:[%s179 + $0x30] sm:$0xff] %v359
      %443 = vst [vmem:[%s179 + $0x38] sm:$0xff] %v362
      %444 = vst [vmem:[%s179 + $0x40] sm:$0xff] %v365
      %445 = vst [vmem:[%s179 + $0x48] sm:$0xff] %v368
      %446 = vst [vmem:[%s179 + $0x50] sm:$0xff] %v371
      %447 = vst [vmem:[%s179 + $0x58] sm:$0xff] %v374
      %448 = vst [vmem:[%s179 + $0x60] sm:$0xff] %v377
      %449 = vst [vmem:[%s179 + $0x68] sm:$0xff] %v380
      %450 = vst [vmem:[%s179 + $0x70] sm:$0xff] %v383
      %451 = vst [vmem:[%s179 + $0x78] sm:$0xff] %v386
      %452 = vst [vmem:[%s179 + $0x80] sm:$0xff] %v389
      %453 = vst [vmem:[%s179 + $0x88] sm:$0xff] %v392
      %454 = vst [vmem:[%s179 + $0x90] sm:$0xff] %v395
      %455 = vst [vmem:[%s179 + $0x98] sm:$0xff] %v398
      %456 = vst [vmem:[%s179 + $0xa0] sm:$0xff] %v401
      %457 = vst [vmem:[%s179 + $0xa8] sm:$0xff] %v404
      %458 = vst [vmem:[%s179 + $0xb0] sm:$0xff] %v407
      %459 = vst [vmem:[%s179 + $0xb8] sm:$0xff] %v410
      %460 = vst [vmem:[%s179 + $0xc0] sm:$0xff] %v413
      %461 = vst [vmem:[%s179 + $0xc8] sm:$0xff] %v416
      %462 = vst [vmem:[%s179 + $0xd0] sm:$0xff] %v419
      %463 = vst [vmem:[%s179 + $0xd8] sm:$0xff] %v422
      %464 = vst [vmem:[%s179 + $0xe0] sm:$0xff] %v425
      %465 = vst [vmem:[%s179 + $0xe8] sm:$0xff] %v428
      %466 = vst [vmem:[%s179 + $0xf0] sm:$0xff] %v431
      %467 = vst [vmem:[%s179 + $0xf8] sm:$0xff] %v434
      %v468 = vadd.f32 %v341, %v344
      %v469 = vadd.f32 %v468, %v347
      %v470 = vadd.f32 %v469, %v350
      %v471 = vadd.f32 %v470, %v353
      %v472 = vadd.f32 %v471, %v356
      %v473 = vadd.f32 %v472, %v359
      %v474 = vadd.f32 %v473, %v362
      %v475 = vadd.f32 %v474, %v365
      %v476 = vadd.f32 %v475, %v368
      %v477 = vadd.f32 %v476, %v371
      %v478 = vadd.f32 %v477, %v374
      %v479 = vadd.f32 %v478, %v377
      %v480 = vadd.f32 %v479, %v380
      %v481 = vadd.f32 %v480, %v383
      %v482 = vadd.f32 %v481, %v386
      %v483 = vadd.f32 %v482, %v389
      %v484 = vadd.f32 %v483, %v392
      %v485 = vadd.f32 %v484, %v395
      %v486 = vadd.f32 %v485, %v398
      %v487 = vadd.f32 %v486, %v401
      %v488 = vadd.f32 %v487, %v404
      %v489 = vadd.f32 %v488, %v407
      %v490 = vadd.f32 %v489, %v410
      %v491 = vadd.f32 %v490, %v413
      %v492 = vadd.f32 %v491, %v416
      %v493 = vadd.f32 %v492, %v419
      %v494 = vadd.f32 %v493, %v422
      %v495 = vadd.f32 %v494, %v425
      %v496 = vadd.f32 %v495, %v428
      %v497 = vadd.f32 %v496, %v431
      %v498 = vadd.f32 %v497, %v434
      %v499 = vrot.slane %v498, 4
      %v500 = vadd.f32 %v498, %v499
      %v501 = vrot.slane %v500, 2
      %v502 = vadd.f32 %v500, %v501
      %v503 = vrot.slane %v502, 1
      %v504 = vadd.f32 %v502, %v503
      %v505 = vmul.f32 %v341, %v341
      %v506 = vmul.f32 %v344, %v344
      %v507 = vmul.f32 %v347, %v347
      %v508 = vmul.f32 %v350, %v350
      %v509 = vmul.f32 %v353, %v353
      %v510 = vmul.f32 %v356, %v356
      %v511 = vmul.f32 %v359, %v359
      %v512 = vmul.f32 %v362, %v362
      %v513 = vmul.f32 %v365, %v365
      %v514 = vmul.f32 %v368, %v368
      %v515 = vmul.f32 %v371, %v371
      %v516 = vmul.f32 %v374, %v374
      %v517 = vmul.f32 %v377, %v377
      %v518 = vmul.f32 %v380, %v380
      %v519 = vmul.f32 %v383, %v383
      %v520 = vmul.f32 %v386, %v386
      %v521 = vmul.f32 %v389, %v389
      %v522 = vmul.f32 %v392, %v392
      %v523 = vmul.f32 %v395, %v395
      %v524 = vmul.f32 %v398, %v398
      %v525 = vmul.f32 %v401, %v401
      %v526 = vmul.f32 %v404, %v404
      %v527 = vmul.f32 %v407, %v407
      %v528 = vmul.f32 %v410, %v410
      %v529 = vmul.f32 %v413, %v413
      %v530 = vmul.f32 %v416, %v416
      %v531 = vmul.f32 %v419, %v419
      %v532 = vmul.f32 %v422, %v422
      %v533 = vmul.f32 %v425, %v425
      %v534 = vmul.f32 %v428, %v428
      %v535 = vmul.f32 %v431, %v431
      %v536 = vmul.f32 %v434, %v434
      %v537 = vadd.f32 %v505, %v506
      %v538 = vadd.f32 %v537, %v507
      %v539 = vadd.f32 %v538, %v508
      %v540 = vadd.f32 %v539, %v509
      %v541 = vadd.f32 %v540, %v510
      %v542 = vadd.f32 %v541, %v511
      %v543 = vadd.f32 %v542, %v512
      %v544 = vadd.f32 %v543, %v513
      %v545 = vadd.f32 %v544, %v514
      %v546 = vadd.f32 %v545, %v515
      %v547 = vadd.f32 %v546, %v516
      %v548 = vadd.f32 %v547, %v517
      %v549 = vadd.f32 %v548, %v518
      %v550 = vadd.f32 %v549, %v519
      %v551 = vadd.f32 %v550, %v520
      %v552 = vadd.f32 %v551, %v521
      %v553 = vadd.f32 %v552, %v522
      %v554 = vadd.f32 %v553, %v523
      %v555 = vadd.f32 %v554, %v524
      %v556 = vadd.f32 %v555, %v525
      %v557 = vadd.f32 %v556, %v526
      %v558 = vadd.f32 %v557, %v527
      %v559 = vadd.f32 %v558, %v528
      %v560 = vadd.f32 %v559, %v529
      %v561 = vadd.f32 %v560, %v530
      %v562 = vadd.f32 %v561, %v531
      %v563 = vadd.f32 %v562, %v532
      %v564 = vadd.f32 %v563, %v533
      %v565 = vadd.f32 %v564, %v534
      %v566 = vadd.f32 %v565, %v535
      %v567 = vadd.f32 %v566, %v536
      %v568 = vrot.slane %v567, 4
      %v569 = vadd.f32 %v567, %v568
      %v570 = vrot.slane %v569, 2
      %v571 = vadd.f32 %v569, %v570
      %v572 = vrot.slane %v571, 1
      %v573 = vadd.f32 %v571, %v572
      %vm574 = vcmask 1040384
      %v575 = vsel %vm574, %v504, %v573
      %vm576 = vcmask 1041408
      %v577 = vsel %vm576, %v575, 0.0
      %578 = vst [vmem:[%s184] sm:$0xff] %v577
      %s579 = smul.u32 32, %s15
      %p580 = scmp.lt.s32.totalorder %s579, 63
      %s581 = scalar_select %p580, %s579, 63
      %s582 = smul.addr %s581, 8
      %s583 = scalar_lea.vmem %s2, %s582
      %p584 = scmp.lt.s32.totalorder %s15, 1
      %s585 = scalar_select %p584, %s15, 1
      %s586 = smul.addr %s585, 8
      %s587 = scalar_lea.vmem %s3, %s586
      // Predicated region
      $region29: #{conv2d_module_forward.2} parent=27 // pred_check
        %p588 = pneg %p80
      $region30: #{conv2d_module_forward.2} parent=27 // pred_check_branch
        %590 = sbr.rel (%p588) target = $region32
      $region31: #{conv2d_module_forward.2} parent=27 // pred_region
        %s591 = smul.u32 32, %s15
      $region32: #{conv2d_module_forward.2} parent=27 // pred_fallthru
        _
      // Predicated region
      $region33: #{conv2d_module_forward.2} parent=27 // pred_check
        %p592 = pneg %p106
      $region34: #{conv2d_module_forward.2} parent=27 // pred_check_branch
        %594 = sbr.rel (%p592) target = $region36
      $region35: #{conv2d_module_forward.2} parent=27 // pred_region
        _
      $region36: #{conv2d_module_forward.2} parent=27 // pred_fallthru
        _
    $region28: #{conv2d_module_forward.2} parent=5 // pred_fallthru
      _
    %p595 = scmp.le.s32.totalorder 2, %s10
    // Predicated region
    $region37: #{conv2d_module_forward.2} parent=5 // pred_check
      %p596 = pneg %p595
    $region38: #{conv2d_module_forward.2} parent=5 // pred_check_branch
      %598 = sbr.rel (%p596) target = $region40
    $region39: #{conv2d_module_forward.2} parent=5 // pred_region
      %s599 = ssub.s32 %s10, 2
      // Predicated region
      $region41: #{conv2d_module_forward.2} parent=39 // pred_check
        %p600 = pneg %p86
      $region42: #{conv2d_module_forward.2} parent=39 // pred_check_branch
        %602 = sbr.rel (%p600) target = $region44
      $region43: #{conv2d_module_forward.2} parent=39 // pred_region
        %s603 = smul.u32 32, %s16
        %p604 = scmp.lt.s32.totalorder %s603, 63
        %s605 = scalar_select %p604, %s603, 63
        %s606 = smul.addr %s605, 8
        %s607 = scalar_lea.vmem %s2, %s606
      $region44: #{conv2d_module_forward.2} parent=39 // pred_fallthru
        _
      // Predicated region
      $region45: #{conv2d_module_forward.2} parent=39 // pred_check
        %p608 = pneg %p112
      $region46: #{conv2d_module_forward.2} parent=39 // pred_check_branch
        %610 = sbr.rel (%p608) target = $region48
      $region47: #{conv2d_module_forward.2} parent=39 // pred_region
        %p611 = scmp.lt.s32.totalorder %s16, 1
        %s612 = scalar_select %p611, %s16, 1
        %s613 = smul.addr %s612, 8
        %s614 = scalar_lea.vmem %s3, %s613
      $region48: #{conv2d_module_forward.2} parent=39 // pred_fallthru
        _
    $region40: #{conv2d_module_forward.2} parent=5 // pred_fallthru
      _
  $region6: #{conv2d_module_forward.2} parent=0 // loop_footer
    %s14 = sadd.s32 1, %s10
  $region7: #{conv2d_module_forward.2} parent=0 // loop_footer_branch
    %9 = sbr.rel target = $region3
  $region8: #{conv2d_module_forward.2} parent=0 // loop_exit
    _

// kernel: conv2d_module_forward.3
$region0: #{conv2d_module_forward.3}
  #allocation0 [shape = 'u32[]', space=smem, size = 0x4, offset = 0x4, fixed_abs, tag = 'smem constant byte address 0x4 - core index']
  #allocation1 [shape = 'u32[72,128]{1,0:T(1,128)}', space=vmem, size = 0x9000, scoped, tag = 'internal scratch']
  %s0 = inlined_call_operand.vmem [shape: f32[512,128], index: 0, kind: input, shape index: {}, may-alias: {0,2}]
  %s1 = inlined_call_operand.vmem [shape: f32[8,128], index: 1, kind: input, shape index: {}]
  %s2 = inlined_call_operand.vmem [shape: f32[512,128], index: 2, kind: output, shape index: {}, may-alias: {0,2}]
  %s3 = sld [smem:[#allocation0]]
  $region41: #{conv2d_module_forward.3} parent=0
    _
  %s5 = ssub.s32 1, %s3
  %s6 = scalar_select 0, %s5, %s3
  loop: start=0, step=1, limit=4
  $region2: #{conv2d_module_forward.3} parent=0 // loop_pre_header
    _
  $region3: #{conv2d_module_forward.3} parent=0 // loop_header
    %s8 = sphi 0, %s12
    %p9 = scmp.ge.s32.totalorder %s8, 4
    %s18 = sphi 0, %s20
    %s21 = sphi 0, %s18
    %s22 = sphi 0, %s21
    %s38 = sphi 0, %s22
    %s42 = sphi 0, %s42
    %s44 = sphi 0, %s42
    %s45 = sphi 0, %s44
    %s59 = sphi 0, %s45
    %s65 = sphi 0, %s67
    %s68 = sphi 0, %s65
    %s69 = sphi 0, %s68
    %s85 = sphi 0, %s69
  $region4: #{conv2d_module_forward.3} parent=0 // loop_header_branch
    %11 = sbr.rel (%p9) target = $region8
  $region5: #{conv2d_module_forward.3} parent=0 // loop_body
    %s13 = ssub.s32 %s8, 1
    %s14 = ssub.s32 %s8, 2
    %s15 = sadd.s32 %s8, 1
    %s16 = ssub.s32 %s8, %s15
    %p17 = scmp.eq.s32.totalorder %s16, 0
    %s19 = sadd.s32 %s18, 1
    %s20 = scalar_select %p17, %s18, %s19
    %p23 = pneg %p17
    %p24 = scmp.eq.s32.totalorder %s8, 1
    %p25 = por %p23, %p24
    %p26 = scmp.ne.s32.totalorder %s18, %s21
    %p27 = scmp.eq.s32.totalorder %s8, 0
    %p28 = por %p26, %p27
    %p29 = scmp.ne.s32.totalorder %s18, %s21
    %p30 = scmp.eq.s32.totalorder %s13, 1
    %p31 = por %p29, %p30
    %p32 = scmp.ne.s32.totalorder %s21, %s22
    %p33 = scmp.eq.s32.totalorder %s13, 0
    %p34 = por %p32, %p33
    %p35 = scmp.ne.s32.totalorder %s21, %s22
    %p36 = scmp.eq.s32.totalorder %s14, 1
    %p37 = por %p35, %p36
    %p39 = scmp.ne.s32.totalorder %s22, %s38
    %p40 = scmp.eq.s32.totalorder %s14, 0
    %p41 = por %p39, %p40
    %s43 = sadd.s32 %s42, 1
    %p46 = scmp.eq.s32.totalorder %s8, 1
    %p47 = scmp.ne.s32.totalorder %s42, %s44
    %p48 = scmp.eq.s32.totalorder %s8, 0
    %p49 = por %p47, %p48
    %p50 = scmp.ne.s32.totalorder %s42, %s44
    %p51 = scmp.eq.s32.totalorder %s13, 1
    %p52 = por %p50, %p51
    %p53 = scmp.ne.s32.totalorder %s44, %s45
    %p54 = scmp.eq.s32.totalorder %s13, 0
    %p55 = por %p53, %p54
    %p56 = scmp.ne.s32.totalorder %s44, %s45
    %p57 = scmp.eq.s32.totalorder %s14, 1
    %p58 = por %p56, %p57
    %p60 = scmp.ne.s32.totalorder %s45, %s59
    %p61 = scmp.eq.s32.totalorder %s14, 0
    %p62 = por %p60, %p61
    %s63 = ssub.s32 %s8, %s15
    %p64 = scmp.eq.s32.totalorder %s63, 0
    %s66 = sadd.s32 %s65, 1
    %s67 = scalar_select %p64, %s65, %s66
    %p70 = pneg %p64
    %p71 = scmp.eq.s32.totalorder %s8, 1
    %p72 = por %p70, %p71
    %p73 = scmp.ne.s32.totalorder %s65, %s68
    %p74 = scmp.eq.s32.totalorder %s8, 0
    %p75 = por %p73, %p74
    %p76 = scmp.ne.s32.totalorder %s65, %s68
    %p77 = scmp.eq.s32.totalorder %s13, 1
    %p78 = por %p76, %p77
    %p79 = scmp.ne.s32.totalorder %s68, %s69
    %p80 = scmp.eq.s32.totalorder %s13, 0
    %p81 = por %p79, %p80
    %p82 = scmp.ne.s32.totalorder %s68, %s69
    %p83 = scmp.eq.s32.totalorder %s14, 1
    %p84 = por %p82, %p83
    %p86 = scmp.ne.s32.totalorder %s69, %s85
    %p87 = scmp.eq.s32.totalorder %s14, 0
    %p88 = por %p86, %p87
    %p89 = scmp.le.s32.totalorder 1, %s8
    %p90 = scmp.lt.s32.totalorder %s8, 3
    %p91 = pnand %p89, %p90
    %p92 = pneg %p91
    // Predicated region
    $region9: #{conv2d_module_forward.3} parent=5 // pred_check
      _
    $region10: #{conv2d_module_forward.3} parent=5 // pred_check_branch
      %94 = sbr.rel (%p91) target = $region12
    $region11: #{conv2d_module_forward.3} parent=5 // pred_region
      %s95 = ssub.s32 %s8, 1
      // Predicated region
      $region13: #{conv2d_module_forward.3} parent=11 // pred_check
        %p96 = pneg %p55
      $region14: #{conv2d_module_forward.3} parent=11 // pred_check_branch
        %98 = sbr.rel (%p96) target = $region16
      $region15: #{conv2d_module_forward.3} parent=11 // pred_region
        _
      $region16: #{conv2d_module_forward.3} parent=11 // pred_fallthru
        _
    $region12: #{conv2d_module_forward.3} parent=5 // pred_fallthru
      _
    %p99 = scmp.lt.s32.totalorder %s8, 2
    // Predicated region
    $region17: #{conv2d_module_forward.3} parent=5 // pred_check
      %p100 = pneg %p99
    $region18: #{conv2d_module_forward.3} parent=5 // pred_check_branch
      %102 = sbr.rel (%p100) target = $region20
    $region19: #{conv2d_module_forward.3} parent=5 // pred_region
      // Predicated region
      $region21: #{conv2d_module_forward.3} parent=19 // pred_check
        %p103 = pneg %p28
      $region22: #{conv2d_module_forward.3} parent=19 // pred_check_branch
        %105 = sbr.rel (%p103) target = $region24
      $region23: #{conv2d_module_forward.3} parent=19 // pred_region
        %s106 = smul.u32 32, %s8
        %p107 = scmp.lt.s32.totalorder %s106, 63
        %s108 = scalar_select %p107, %s106, 63
        %s109 = smul.addr %s108, 8
        %s110 = scalar_lea.vmem %s0, %s109
        %s111 = smul.u32 32, %s8
      $region24: #{conv2d_module_forward.3} parent=19 // pred_fallthru
        _
    $region20: #{conv2d_module_forward.3} parent=5 // pred_fallthru
      _
    %p112 = scmp.le.s32.totalorder 1, %s8
    %p113 = scmp.lt.s32.totalorder %s8, 3
    %p114 = pnand %p112, %p113
    %p115 = pneg %p114
    // Predicated region
    $region25: #{conv2d_module_forward.3} parent=5 // pred_check
      _
    $region26: #{conv2d_module_forward.3} parent=5 // pred_check_branch
      %117 = sbr.rel (%p114) target = $region28
    $region27: #{conv2d_module_forward.3} parent=5 // pred_region
      %s118 = ssub.s32 %s8, 1
      %s119 = smul.u32 32, %s13
      %p120 = scmp.lt.s32.totalorder %s119, 63
      %s121 = scalar_select %p120, %s119, 63
      %s122 = smul.addr %s121, 8
      %s123 = scalar_lea.vmem %s0, %s122
      %p124 = pneg %p34
      %p125 = pneg %p31
      %p126 = pneg %p55
      %p127 = pneg %p52
      %p128 = pneg %p81
      %p129 = pneg %p78
      %s130 = smul.u32 32, %s13
      %p131 = scmp.lt.s32.totalorder %s130, 63
      %s132 = scalar_select %p131, %s130, 63
      %s133 = smul.addr %s132, 8
      %s134 = scalar_lea.vmem %s2, %s133
      %s135 = smul.u32 32, %s13
      %p136 = scmp.lt.s32.totalorder %s135, 63
      %s137 = scalar_select %p136, %s135, 63
      %s138 = smul.addr %s137, 8
      %s139 = scalar_lea.vmem %s0, %s138
      %s140 = smul.u32 32, %s13
      %s141 = smul.u32 32, %s13
      %p142 = scmp.lt.s32.totalorder %s141, 63
      %s143 = scalar_select %p142, %s141, 63
      %s144 = smul.addr %s143, 8
      %s145 = scalar_lea.vmem %s2, %s144
      %s146 = smul.u32 32, %s13
      %v147 = vld [vmem:[%s139] sm:$0xff]
      %v148 = vld [vmem:[%s139 + $0x8] sm:$0xff]
      %v149 = vld [vmem:[%s139 + $0x10] sm:$0xff]
      %v150 = vld [vmem:[%s139 + $0x18] sm:$0xff]
      %v151 = vld [vmem:[%s139 + $0x20] sm:$0xff]
      %v152 = vld [vmem:[%s139 + $0x28] sm:$0xff]
      %v153 = vld [vmem:[%s139 + $0x30] sm:$0xff]
      %v154 = vld [vmem:[%s139 + $0x38] sm:$0xff]
      %v155 = vld [vmem:[%s139 + $0x40] sm:$0xff]
      %v156 = vld [vmem:[%s139 + $0x48] sm:$0xff]
      %v157 = vld [vmem:[%s139 + $0x50] sm:$0xff]
      %v158 = vld [vmem:[%s139 + $0x58] sm:$0xff]
      %v159 = vld [vmem:[%s139 + $0x60] sm:$0xff]
      %v160 = vld [vmem:[%s139 + $0x68] sm:$0xff]
      %v161 = vld [vmem:[%s139 + $0x70] sm:$0xff]
      %v162 = vld [vmem:[%s139 + $0x78] sm:$0xff]
      %v163 = vld [vmem:[%s139 + $0x80] sm:$0xff]
      %v164 = vld [vmem:[%s139 + $0x88] sm:$0xff]
      %v165 = vld [vmem:[%s139 + $0x90] sm:$0xff]
      %v166 = vld [vmem:[%s139 + $0x98] sm:$0xff]
      %v167 = vld [vmem:[%s139 + $0xa0] sm:$0xff]
      %v168 = vld [vmem:[%s139 + $0xa8] sm:$0xff]
      %v169 = vld [vmem:[%s139 + $0xb0] sm:$0xff]
      %v170 = vld [vmem:[%s139 + $0xb8] sm:$0xff]
      %v171 = vld [vmem:[%s139 + $0xc0] sm:$0xff]
      %v172 = vld [vmem:[%s139 + $0xc8] sm:$0xff]
      %v173 = vld [vmem:[%s139 + $0xd0] sm:$0xff]
      %v174 = vld [vmem:[%s139 + $0xd8] sm:$0xff]
      %v175 = vld [vmem:[%s139 + $0xe0] sm:$0xff]
      %v176 = vld [vmem:[%s139 + $0xe8] sm:$0xff]
      %v177 = vld [vmem:[%s139 + $0xf0] sm:$0xff]
      %v178 = vld [vmem:[%s139 + $0xf8] sm:$0xff]
      %v179 = vld [vmem:[%s1] sm:$0x1]
      %v180 = vperm.slane %v179, 0
      %v181 = vmul.f32 %v147, %v180
      %v182 = vmul.f32 %v148, %v180
      %v183 = vmul.f32 %v149, %v180
      %v184 = vmul.f32 %v150, %v180
      %v185 = vmul.f32 %v151, %v180
      %v186 = vmul.f32 %v152, %v180
      %v187 = vmul.f32 %v153, %v180
      %v188 = vmul.f32 %v154, %v180
      %v189 = vmul.f32 %v155, %v180
      %v190 = vmul.f32 %v156, %v180
      %v191 = vmul.f32 %v157, %v180
      %v192 = vmul.f32 %v158, %v180
      %v193 = vmul.f32 %v159, %v180
      %v194 = vmul.f32 %v160, %v180
      %v195 = vmul.f32 %v161, %v180
      %v196 = vmul.f32 %v162, %v180
      %v197 = vmul.f32 %v163, %v180
      %v198 = vmul.f32 %v164, %v180
      %v199 = vmul.f32 %v165, %v180
      %v200 = vmul.f32 %v166, %v180
      %v201 = vmul.f32 %v167, %v180
      %v202 = vmul.f32 %v168, %v180
      %v203 = vmul.f32 %v169, %v180
      %v204 = vmul.f32 %v170, %v180
      %v205 = vmul.f32 %v171, %v180
      %v206 = vmul.f32 %v172, %v180
      %v207 = vmul.f32 %v173, %v180
      %v208 = vmul.f32 %v174, %v180
      %v209 = vmul.f32 %v175, %v180
      %v210 = vmul.f32 %v176, %v180
      %v211 = vmul.f32 %v177, %v180
      %v212 = vmul.f32 %v178, %v180
      %v213 = vld [vmem:[%s1 + $0x1] sm:$0x1]
      %v214 = vperm.slane %v213, 0
      %v215 = vadd.f32 %v181, %v214
      %v216 = vadd.f32 %v182, %v214
      %v217 = vadd.f32 %v183, %v214
      %v218 = vadd.f32 %v184, %v214
      %v219 = vadd.f32 %v185, %v214
      %v220 = vadd.f32 %v186, %v214
      %v221 = vadd.f32 %v187, %v214
      %v222 = vadd.f32 %v188, %v214
      %v223 = vadd.f32 %v189, %v214
      %v224 = vadd.f32 %v190, %v214
      %v225 = vadd.f32 %v191, %v214
      %v226 = vadd.f32 %v192, %v214
      %v227 = vadd.f32 %v193, %v214
      %v228 = vadd.f32 %v194, %v214
      %v229 = vadd.f32 %v195, %v214
      %v230 = vadd.f32 %v196, %v214
      %v231 = vadd.f32 %v197, %v214
      %v232 = vadd.f32 %v198, %v214
      %v233 = vadd.f32 %v199, %v214
      %v234 = vadd.f32 %v200, %v214
      %v235 = vadd.f32 %v201, %v214
      %v236 = vadd.f32 %v202, %v214
      %v237 = vadd.f32 %v203, %v214
      %v238 = vadd.f32 %v204, %v214
      %v239 = vadd.f32 %v205, %v214
      %v240 = vadd.f32 %v206, %v214
      %v241 = vadd.f32 %v207, %v214
      %v242 = vadd.f32 %v208, %v214
      %v243 = vadd.f32 %v209, %v214
      %v244 = vadd.f32 %v210, %v214
      %v245 = vadd.f32 %v211, %v214
      %v246 = vadd.f32 %v212, %v214
      %vm247 = vcmp.ge.f32.partialorder %v215, 0.0
      %vm248 = vcmp.ge.f32.partialorder %v216, 0.0
      %vm249 = vcmp.ge.f32.partialorder %v217, 0.0
      %vm250 = vcmp.ge.f32.partialorder %v218, 0.0
      %vm251 = vcmp.ge.f32.partialorder %v219, 0.0
      %vm252 = vcmp.ge.f32.partialorder %v220, 0.0
      %vm253 = vcmp.ge.f32.partialorder %v221, 0.0
      %vm254 = vcmp.ge.f32.partialorder %v222, 0.0
      %vm255 = vcmp.ge.f32.partialorder %v223, 0.0
      %vm256 = vcmp.ge.f32.partialorder %v224, 0.0
      %vm257 = vcmp.ge.f32.partialorder %v225, 0.0
      %vm258 = vcmp.ge.f32.partialorder %v226, 0.0
      %vm259 = vcmp.ge.f32.partialorder %v227, 0.0
      %vm260 = vcmp.ge.f32.partialorder %v228, 0.0
      %vm261 = vcmp.ge.f32.partialorder %v229, 0.0
      %vm262 = vcmp.ge.f32.partialorder %v230, 0.0
      %vm263 = vcmp.ge.f32.partialorder %v231, 0.0
      %vm264 = vcmp.ge.f32.partialorder %v232, 0.0
      %vm265 = vcmp.ge.f32.partialorder %v233, 0.0
      %vm266 = vcmp.ge.f32.partialorder %v234, 0.0
      %vm267 = vcmp.ge.f32.partialorder %v235, 0.0
      %vm268 = vcmp.ge.f32.partialorder %v236, 0.0
      %vm269 = vcmp.ge.f32.partialorder %v237, 0.0
      %vm270 = vcmp.ge.f32.partialorder %v238, 0.0
      %vm271 = vcmp.ge.f32.partialorder %v239, 0.0
      %vm272 = vcmp.ge.f32.partialorder %v240, 0.0
      %vm273 = vcmp.ge.f32.partialorder %v241, 0.0
      %vm274 = vcmp.ge.f32.partialorder %v242, 0.0
      %vm275 = vcmp.ge.f32.partialorder %v243, 0.0
      %vm276 = vcmp.ge.f32.partialorder %v244, 0.0
      %vm277 = vcmp.ge.f32.partialorder %v245, 0.0
      %vm278 = vcmp.ge.f32.partialorder %v246, 0.0
      %v279 = vmul.f32 %v215, 0.1
      %v280 = vmul.f32 %v216, 0.1
      %v281 = vmul.f32 %v217, 0.1
      %v282 = vmul.f32 %v218, 0.1
      %v283 = vmul.f32 %v219, 0.1
      %v284 = vmul.f32 %v220, 0.1
      %v285 = vmul.f32 %v221, 0.1
      %v286 = vmul.f32 %v222, 0.1
      %v287 = vmul.f32 %v223, 0.1
      %v288 = vmul.f32 %v224, 0.1
      %v289 = vmul.f32 %v225, 0.1
      %v290 = vmul.f32 %v226, 0.1
      %v291 = vmul.f32 %v227, 0.1
      %v292 = vmul.f32 %v228, 0.1
      %v293 = vmul.f32 %v229, 0.1
      %v294 = vmul.f32 %v230, 0.1
      %v295 = vmul.f32 %v231, 0.1
      %v296 = vmul.f32 %v232, 0.1
      %v297 = vmul.f32 %v233, 0.1
      %v298 = vmul.f32 %v234, 0.1
      %v299 = vmul.f32 %v235, 0.1
      %v300 = vmul.f32 %v236, 0.1
      %v301 = vmul.f32 %v237, 0.1
      %v302 = vmul.f32 %v238, 0.1
      %v303 = vmul.f32 %v239, 0.1
      %v304 = vmul.f32 %v240, 0.1
      %v305 = vmul.f32 %v241, 0.1
      %v306 = vmul.f32 %v242, 0.1
      %v307 = vmul.f32 %v243, 0.1
      %v308 = vmul.f32 %v244, 0.1
      %v309 = vmul.f32 %v245, 0.1
      %v310 = vmul.f32 %v246, 0.1
      %v311 = vsel %vm247, %v215, %v279
      %v312 = vsel %vm248, %v216, %v280
      %v313 = vsel %vm249, %v217, %v281
      %v314 = vsel %vm250, %v218, %v282
      %v315 = vsel %vm251, %v219, %v283
      %v316 = vsel %vm252, %v220, %v284
      %v317 = vsel %vm253, %v221, %v285
      %v318 = vsel %vm254, %v222, %v286
      %v319 = vsel %vm255, %v223, %v287
      %v320 = vsel %vm256, %v224, %v288
      %v321 = vsel %vm257, %v225, %v289
      %v322 = vsel %vm258, %v226, %v290
      %v323 = vsel %vm259, %v227, %v291
      %v324 = vsel %vm260, %v228, %v292
      %v325 = vsel %vm261, %v229, %v293
      %v326 = vsel %vm262, %v230, %v294
      %v327 = vsel %vm263, %v231, %v295
      %v328 = vsel %vm264, %v232, %v296
      %v329 = vsel %vm265, %v233, %v297
      %v330 = vsel %vm266, %v234, %v298
      %v331 = vsel %vm267, %v235, %v299
      %v332 = vsel %vm268, %v236, %v300
      %v333 = vsel %vm269, %v237, %v301
      %v334 = vsel %vm270, %v238, %v302
      %v335 = vsel %vm271, %v239, %v303
      %v336 = vsel %vm272, %v240, %v304
      %v337 = vsel %vm273, %v241, %v305
      %v338 = vsel %vm274, %v242, %v306
      %v339 = vsel %vm275, %v243, %v307
      %v340 = vsel %vm276, %v244, %v308
      %v341 = vsel %vm277, %v245, %v309
      %v342 = vsel %vm278, %v246, %v310
      %343 = vst [vmem:[%s145] sm:$0xff] %v311
      %344 = vst [vmem:[%s145 + $0x8] sm:$0xff] %v312
      %345 = vst [vmem:[%s145 + $0x10] sm:$0xff] %v313
      %346 = vst [vmem:[%s145 + $0x18] sm:$0xff] %v314
      %347 = vst [vmem:[%s145 + $0x20] sm:$0xff] %v315
      %348 = vst [vmem:[%s145 + $0x28] sm:$0xff] %v316
      %349 = vst [vmem:[%s145 + $0x30] sm:$0xff] %v317
      %350 = vst [vmem:[%s145 + $0x38] sm:$0xff] %v318
      %351 = vst [vmem:[%s145 + $0x40] sm:$0xff] %v319
      %352 = vst [vmem:[%s145 + $0x48] sm:$0xff] %v320
      %353 = vst [vmem:[%s145 + $0x50] sm:$0xff] %v321
      %354 = vst [vmem:[%s145 + $0x58] sm:$0xff] %v322
      %355 = vst [vmem:[%s145 + $0x60] sm:$0xff] %v323
      %356 = vst [vmem:[%s145 + $0x68] sm:$0xff] %v324
      %357 = vst [vmem:[%s145 + $0x70] sm:$0xff] %v325
      %358 = vst [vmem:[%s145 + $0x78] sm:$0xff] %v326
      %359 = vst [vmem:[%s145 + $0x80] sm:$0xff] %v327
      %360 = vst [vmem:[%s145 + $0x88] sm:$0xff] %v328
      %361 = vst [vmem:[%s145 + $0x90] sm:$0xff] %v329
      %362 = vst [vmem:[%s145 + $0x98] sm:$0xff] %v330
      %363 = vst [vmem:[%s145 + $0xa0] sm:$0xff] %v331
      %364 = vst [vmem:[%s145 + $0xa8] sm:$0xff] %v332
      %365 = vst [vmem:[%s145 + $0xb0] sm:$0xff] %v333
      %366 = vst [vmem:[%s145 + $0xb8] sm:$0xff] %v334
      %367 = vst [vmem:[%s145 + $0xc0] sm:$0xff] %v335
      %368 = vst [vmem:[%s145 + $0xc8] sm:$0xff] %v336
      %369 = vst [vmem:[%s145 + $0xd0] sm:$0xff] %v337
      %370 = vst [vmem:[%s145 + $0xd8] sm:$0xff] %v338
      %371 = vst [vmem:[%s145 + $0xe0] sm:$0xff] %v339
      %372 = vst [vmem:[%s145 + $0xe8] sm:$0xff] %v340
      %373 = vst [vmem:[%s145 + $0xf0] sm:$0xff] %v341
      %374 = vst [vmem:[%s145 + $0xf8] sm:$0xff] %v342
      %s375 = smul.u32 32, %s13
      %p376 = scmp.lt.s32.totalorder %s375, 63
      %s377 = scalar_select %p376, %s375, 63
      %s378 = smul.addr %s377, 8
      %s379 = scalar_lea.vmem %s2, %s378
      // Predicated region
      $region29: #{conv2d_module_forward.3} parent=27 // pred_check
        %p380 = pneg %p78
      $region30: #{conv2d_module_forward.3} parent=27 // pred_check_branch
        %382 = sbr.rel (%p380) target = $region32
      $region31: #{conv2d_module_forward.3} parent=27 // pred_region
        %s383 = smul.u32 32, %s13
      $region32: #{conv2d_module_forward.3} parent=27 // pred_fallthru
        _
    $region28: #{conv2d_module_forward.3} parent=5 // pred_fallthru
      _
    %p384 = scmp.le.s32.totalorder 2, %s8
    // Predicated region
    $region33: #{conv2d_module_forward.3} parent=5 // pred_check
      %p385 = pneg %p384
    $region34: #{conv2d_module_forward.3} parent=5 // pred_check_branch
      %387 = sbr.rel (%p385) target = $region36
    $region35: #{conv2d_module_forward.3} parent=5 // pred_region
      %s388 = ssub.s32 %s8, 2
      // Predicated region
      $region37: #{conv2d_module_forward.3} parent=35 // pred_check
        %p389 = pneg %p84
      $region38: #{conv2d_module_forward.3} parent=35 // pred_check_branch
        %391 = sbr.rel (%p389) target = $region40
      $region39: #{conv2d_module_forward.3} parent=35 // pred_region
        %s392 = smul.u32 32, %s14
        %p393 = scmp.lt.s32.totalorder %s392, 63
        %s394 = scalar_select %p393, %s392, 63
        %s395 = smul.addr %s394, 8
        %s396 = scalar_lea.vmem %s2, %s395
      $region40: #{conv2d_module_forward.3} parent=35 // pred_fallthru
        _
    $region36: #{conv2d_module_forward.3} parent=5 // pred_fallthru
      _
  $region6: #{conv2d_module_forward.3} parent=0 // loop_footer
    %s12 = sadd.s32 1, %s8
  $region7: #{conv2d_module_forward.3} parent=0 // loop_footer_branch
    %7 = sbr.rel target = $region3
  $region8: #{conv2d_module_forward.3} parent=0 // loop_exit
    _

</llo_original>
